<compile_context>
chip_gen: v7x
topology: tpu7x:2x2x1
jax: 0.10.0
libtpu: 0.0.40
codegen_flags: <defaults>
</compile_context>

<pallas_src>
import functools

import jax
import jax.numpy as jnp
from jax.experimental import pallas as pl
from jax.experimental.pallas import tpu as pltpu

_BN_EPS = 1e-5  # matches torch.nn.BatchNorm1d default


def _mlp_kernel(x_ref, w1_ref, b1_ref, w2_ref, b2_ref, w3_ref, b3_ref,
                w4_ref, b4_ref, o_ref):
    """Fused 4-layer MLP on one row tile: 3x (bf16 matmul + f32 bias/ReLU) + matmul."""
    h = x_ref[...]  # bf16 row tile
    # Layer 1
    a = jnp.dot(h, w1_ref[...], preferred_element_type=jnp.float32) + b1_ref[...]
    h = jnp.maximum(a, 0.0).astype(jnp.bfloat16)
    # Layer 2
    a = jnp.dot(h, w2_ref[...], preferred_element_type=jnp.float32) + b2_ref[...]
    h = jnp.maximum(a, 0.0).astype(jnp.bfloat16)
    # Layer 3
    a = jnp.dot(h, w3_ref[...], preferred_element_type=jnp.float32) + b3_ref[...]
    h = jnp.maximum(a, 0.0).astype(jnp.bfloat16)
    # Layer 4 (no BN / ReLU), lane-dense padded output width
    o = jnp.dot(h, w4_ref[...], preferred_element_type=jnp.float32) + b4_ref[...]
    o_ref[...] = o.astype(o_ref.dtype)


def _fold_bn(w, b, gamma, beta, mean, var, eps=_BN_EPS):
    """Fold eval-mode BatchNorm1d into the preceding Linear (w:[K,N], b:[N]), in f32."""
    s = gamma / jnp.sqrt(var + eps)
    return w * s[None, :], b * s + (beta - mean * s)


def _round_up(x, m):
    return ((x + m - 1) // m) * m


@functools.partial(jax.jit, static_argnames=("tm",))
def sharelock_mlp_pallas(x, params, *, tm=512):
    """x: [..., input_dim]; params: flat tuple of linear + BN parameters.

    Returns [..., output_dim] with eval-mode ShareLockMLP semantics.
    """
    (w1, b1, g1, be1, m1, v1,
     w2, b2, g2, be2, m2, v2,
     w3, b3, g3, be3, m3, v3,
     w4, b4) = params

    # Fold BN in f32, then cast weights to bf16 for the MXU. Biases stay f32
    # (added onto the f32 accumulator).
    fw1, fb1 = _fold_bn(w1, b1, g1, be1, m1, v1)
    fw2, fb2 = _fold_bn(w2, b2, g2, be2, m2, v2)
    fw3, fb3 = _fold_bn(w3, b3, g3, be3, m3, v3)
    fw4, fb4 = w4, b4

    orig_shape = x.shape
    K = orig_shape[-1]
    H = fw1.shape[1]
    O = fw4.shape[1]
    O_pad = max(128, _round_up(O, 128))  # lane-dense output width

    x2d = x.reshape(-1, K).astype(jnp.bfloat16)
    M = x2d.shape[0]

    # Row tile selection. No wrapper-side padding of x: Pallas masks the
    # partial last block. Keep >= 2 grid steps when possible (v7x megacore).
    if M >= 2 * tm:
        tm_eff = tm
    elif M >= 16:
        tm_eff = min(tm, _round_up((M + 1) // 2, 8))
    else:
        tm_eff = _round_up(max(M, 1), 8)
    grid = ((M + tm_eff - 1) // tm_eff,)

    fw1b = fw1.astype(jnp.bfloat16)
    fw2b = fw2.astype(jnp.bfloat16)
    fw3b = fw3.astype(jnp.bfloat16)
    # Zero-pad the last layer out to O_pad lanes.
    fw4b = jnp.zeros((H, O_pad), jnp.bfloat16).at[:, :O].set(fw4.astype(jnp.bfloat16))
    fb4p = jnp.zeros((1, O_pad), jnp.float32).at[0, :O].set(fb4.astype(jnp.float32))

    # Biases as (1, N) f32 rows (broadcast over the row tile in-kernel).
    fb1 = fb1.astype(jnp.float32).reshape(1, H)
    fb2 = fb2.astype(jnp.float32).reshape(1, H)
    fb3 = fb3.astype(jnp.float32).reshape(1, H)

    # VMEM budget: single-buffered bf16 weights + f32 biases, double-buffered
    # x (bf16) / out (f32) tiles, plus f32 layer intermediates. Cap at 48 MiB
    # (headroom inside v7x's 64 MiB physical VMEM).
    resident = (2 * (K * H + 2 * H * H + H * O_pad)          # bf16 weights
                + 4 * (3 * H + O_pad))                       # f32 biases
    streaming = (2 * 2 * tm_eff * K                          # x double buffer
                 + 2 * 4 * tm_eff * O_pad                    # out double buffer
                 + 3 * 4 * tm_eff * H)                       # f32 intermediates
    est = resident + streaming
    vmem_cap = 48 << 20
    assert resident <= vmem_cap, (
        "Resident folded weights exceed the VMEM budget; a weight-tiled "
        "fallback is required for this hidden size.")
    vmem_limit = int(min(max(32 << 20, int(1.5 * est)), vmem_cap))

    res = pl.Buffered(1)  # single-buffer the VMEM-resident weights / biases

    out = pl.pallas_call(
        _mlp_kernel,
        out_shape=jax.ShapeDtypeStruct((M, O_pad), x.dtype),
        grid_spec=pltpu.PrefetchScalarGridSpec(
            num_scalar_prefetch=0,
            grid=grid,
            in_specs=[
                pl.BlockSpec((tm_eff, K), lambda i: (i, 0)),                       # x row tile
                pl.BlockSpec((K, H), lambda i: (0, 0), pipeline_mode=res),         # w1
                pl.BlockSpec((1, H), lambda i: (0, 0), pipeline_mode=res),         # b1
                pl.BlockSpec((H, H), lambda i: (0, 0), pipeline_mode=res),         # w2
                pl.BlockSpec((1, H), lambda i: (0, 0), pipeline_mode=res),         # b2
                pl.BlockSpec((H, H), lambda i: (0, 0), pipeline_mode=res),         # w3
                pl.BlockSpec((1, H), lambda i: (0, 0), pipeline_mode=res),         # b3
                pl.BlockSpec((H, O_pad), lambda i: (0, 0), pipeline_mode=res),     # w4 (padded)
                pl.BlockSpec((1, O_pad), lambda i: (0, 0), pipeline_mode=res),     # b4 (padded)
            ],
            out_specs=pl.BlockSpec((tm_eff, O_pad), lambda i: (i, 0)),
        ),
        compiler_params=pltpu.CompilerParams(
            dimension_semantics=("parallel",),
            vmem_limit_bytes=vmem_limit),
    )(x2d, fw1b, fb1, fw2b, fb2, fw3b, fb3, fw4b, fb4p)

    out = out[:, :O]
    return out.reshape(*orig_shape[:-1], O)


def sharelock_mlp_reference(x, params, eps=_BN_EPS):
    """Pure-JAX f32 eval-mode reference matching the PyTorch module."""
    (w1, b1, g1, be1, m1, v1,
     w2, b2, g2, be2, m2, v2,
     w3, b3, g3, be3, m3, v3,
     w4, b4) = params
    h = x
    for (w, b, g, be, m, v) in ((w1, b1, g1, be1, m1, v1),
                                (w2, b2, g2, be2, m2, v2),
                                (w3, b3, g3, be3, m3, v3)):
        h = h @ w + b
        h = (h - m) / jnp.sqrt(v + eps) * g + be
        h = jnp.maximum(h, 0.0)
        # Dropout: identity in eval mode.
    return h @ w4 + b4


def _init_linear(key, fan_in, fan_out):
    kw, kb = jax.random.split(key)
    bound = 1.0 / (fan_in ** 0.5)
    w = jax.random.uniform(kw, (fan_in, fan_out), jnp.float32, -bound, bound)
    b = jax.random.uniform(kb, (fan_out,), jnp.float32, -bound, bound)
    return w, b


def _init_bn(key, dim):
    kg, kb, km, kv = jax.random.split(key, 4)
    gamma = 1.0 + 0.1 * jax.random.normal(kg, (dim,), jnp.float32)
    beta = 0.1 * jax.random.normal(kb, (dim,), jnp.float32)
    mean = 0.05 * jax.random.normal(km, (dim,), jnp.float32)
    var = jax.random.uniform(kv, (dim,), jnp.float32, 0.5, 1.5)
    return gamma, beta, mean, var


if __name__ == "__main__":
    key = jax.random.PRNGKey(0)

    batch = 32
    input_dim, hidden_dim, output_dim = 128, 256, 64

    keys = jax.random.split(key, 8)
    x = jax.random.normal(keys[0], (batch, input_dim), dtype=jnp.float32)

    w1, b1 = _init_linear(keys[1], input_dim, hidden_dim)
    g1, be1, m1, v1 = _init_bn(keys[2], hidden_dim)
    w2, b2 = _init_linear(keys[3], hidden_dim, hidden_dim)
    g2, be2, m2, v2 = _init_bn(keys[4], hidden_dim)
    w3, b3 = _init_linear(keys[5], hidden_dim, hidden_dim)
    g3, be3, m3, v3 = _init_bn(keys[6], hidden_dim)
    w4, b4 = _init_linear(keys[7], hidden_dim, output_dim)

    params = (w1, b1, g1, be1, m1, v1,
              w2, b2, g2, be2, m2, v2,
              w3, b3, g3, be3, m3, v3,
              w4, b4)

    out = sharelock_mlp_pallas(x, params)
    out = jax.block_until_ready(out)

    ref = sharelock_mlp_reference(x, params)
    assert out.shape == (batch, output_dim)
    max_err = float(jnp.max(jnp.abs(out - ref)))
    # bf16 matmul operands (f32 accumulation) => looser tolerance vs f32 ref.
    assert jnp.allclose(out, ref, atol=1e-1, rtol=5e-2), max_err

    print("KERNEL_OK")
</pallas_src>

<mosaic_0001>
module attributes {stable_mosaic.version = 11 : i64} {
  func.func @_mlp_kernel(%arg0: i32, %arg1: memref<16x128xbf16, #tpu.memory_space<vmem>>, %arg2: memref<128x256xbf16, #tpu.memory_space<vmem>>, %arg3: memref<1x256xf32, #tpu.memory_space<vmem>>, %arg4: memref<256x256xbf16, #tpu.memory_space<vmem>>, %arg5: memref<1x256xf32, #tpu.memory_space<vmem>>, %arg6: memref<256x256xbf16, #tpu.memory_space<vmem>>, %arg7: memref<1x256xf32, #tpu.memory_space<vmem>>, %arg8: memref<256x128xbf16, #tpu.memory_space<vmem>>, %arg9: memref<1x128xf32, #tpu.memory_space<vmem>>, %arg10: memref<16x128xf32, #tpu.memory_space<vmem>>) attributes {dimension_semantics = [#tpu.dimension_semantics<parallel>], iteration_bounds = array<i64: 2>, scalar_prefetch = 0 : i64, scratch_operands = 0 : i64, tpu.core_type = #tpu.core_type<tc>, window_params = [{transform_indices = @transform_0, window_bounds = array<i64: 16, 128>}, {pipeline_mode = #tpu.pipeline_mode<synchronous>, transform_indices = @transform_1, window_bounds = array<i64: 128, 256>}, {pipeline_mode = #tpu.pipeline_mode<synchronous>, transform_indices = @transform_2, window_bounds = array<i64: 1, 256>}, {pipeline_mode = #tpu.pipeline_mode<synchronous>, transform_indices = @transform_3, window_bounds = array<i64: 256, 256>}, {pipeline_mode = #tpu.pipeline_mode<synchronous>, transform_indices = @transform_4, window_bounds = array<i64: 1, 256>}, {pipeline_mode = #tpu.pipeline_mode<synchronous>, transform_indices = @transform_5, window_bounds = array<i64: 256, 256>}, {pipeline_mode = #tpu.pipeline_mode<synchronous>, transform_indices = @transform_6, window_bounds = array<i64: 1, 256>}, {pipeline_mode = #tpu.pipeline_mode<synchronous>, transform_indices = @transform_7, window_bounds = array<i64: 256, 128>}, {pipeline_mode = #tpu.pipeline_mode<synchronous>, transform_indices = @transform_8, window_bounds = array<i64: 1, 128>}, {transform_indices = @transform_9, window_bounds = array<i64: 16, 128>}]} {
    %c0 = arith.constant 0 : index
    %c0_0 = arith.constant 0 : index
    %0 = vector.load %arg1[%c0, %c0_0] : memref<16x128xbf16, #tpu.memory_space<vmem>>, vector<16x128xbf16>
    %c0_1 = arith.constant 0 : index
    %c0_2 = arith.constant 0 : index
    %1 = vector.load %arg2[%c0_1, %c0_2] : memref<128x256xbf16, #tpu.memory_space<vmem>>, vector<128x256xbf16>
    %cst = arith.constant dense<0.000000e+00> : vector<16x256xf32>
    %2 = tpu.matmul %0, %1, %cst {dimension_numbers = #tpu.dot_dimension_numbers<[1], [0], [0], [1], [0, 0, 1, 1], [], []>} : vector<16x128xbf16>, vector<128x256xbf16>, vector<16x256xf32> -> vector<16x256xf32>
    %c0_3 = arith.constant 0 : index
    %c0_4 = arith.constant 0 : index
    %3 = vector.load %arg3[%c0_3, %c0_4] : memref<1x256xf32, #tpu.memory_space<vmem>>, vector<1x256xf32>
    %4 = vector.broadcast %3 : vector<1x256xf32> to vector<16x256xf32>
    %5 = arith.addf %2, %4 : vector<16x256xf32>
    %cst_5 = arith.constant 0.000000e+00 : f32
    %6 = vector.broadcast %cst_5 : f32 to vector<16x256xf32>
    %7 = arith.maximumf %5, %6 : vector<16x256xf32>
    %8 = arith.truncf %7 : vector<16x256xf32> to vector<16x256xbf16>
    %c0_6 = arith.constant 0 : index
    %c0_7 = arith.constant 0 : index
    %9 = vector.load %arg4[%c0_6, %c0_7] : memref<256x256xbf16, #tpu.memory_space<vmem>>, vector<256x256xbf16>
    %cst_8 = arith.constant dense<0.000000e+00> : vector<16x256xf32>
    %10 = tpu.matmul %8, %9, %cst_8 {dimension_numbers = #tpu.dot_dimension_numbers<[1], [0], [0], [1], [0, 0, 1, 1], [], []>} : vector<16x256xbf16>, vector<256x256xbf16>, vector<16x256xf32> -> vector<16x256xf32>
    %c0_9 = arith.constant 0 : index
    %c0_10 = arith.constant 0 : index
    %11 = vector.load %arg5[%c0_9, %c0_10] : memref<1x256xf32, #tpu.memory_space<vmem>>, vector<1x256xf32>
    %12 = vector.broadcast %11 : vector<1x256xf32> to vector<16x256xf32>
    %13 = arith.addf %10, %12 : vector<16x256xf32>
    %cst_11 = arith.constant 0.000000e+00 : f32
    %14 = vector.broadcast %cst_11 : f32 to vector<16x256xf32>
    %15 = arith.maximumf %13, %14 : vector<16x256xf32>
    %16 = arith.truncf %15 : vector<16x256xf32> to vector<16x256xbf16>
    %c0_12 = arith.constant 0 : index
    %c0_13 = arith.constant 0 : index
    %17 = vector.load %arg6[%c0_12, %c0_13] : memref<256x256xbf16, #tpu.memory_space<vmem>>, vector<256x256xbf16>
    %cst_14 = arith.constant dense<0.000000e+00> : vector<16x256xf32>
    %18 = tpu.matmul %16, %17, %cst_14 {dimension_numbers = #tpu.dot_dimension_numbers<[1], [0], [0], [1], [0, 0, 1, 1], [], []>} : vector<16x256xbf16>, vector<256x256xbf16>, vector<16x256xf32> -> vector<16x256xf32>
    %c0_15 = arith.constant 0 : index
    %c0_16 = arith.constant 0 : index
    %19 = vector.load %arg7[%c0_15, %c0_16] : memref<1x256xf32, #tpu.memory_space<vmem>>, vector<1x256xf32>
    %20 = vector.broadcast %19 : vector<1x256xf32> to vector<16x256xf32>
    %21 = arith.addf %18, %20 : vector<16x256xf32>
    %cst_17 = arith.constant 0.000000e+00 : f32
    %22 = vector.broadcast %cst_17 : f32 to vector<16x256xf32>
    %23 = arith.maximumf %21, %22 : vector<16x256xf32>
    %24 = arith.truncf %23 : vector<16x256xf32> to vector<16x256xbf16>
    %c0_18 = arith.constant 0 : index
    %c0_19 = arith.constant 0 : index
    %25 = vector.load %arg8[%c0_18, %c0_19] : memref<256x128xbf16, #tpu.memory_space<vmem>>, vector<256x128xbf16>
    %cst_20 = arith.constant dense<0.000000e+00> : vector<16x128xf32>
    %26 = tpu.matmul %24, %25, %cst_20 {dimension_numbers = #tpu.dot_dimension_numbers<[1], [0], [0], [1], [0, 0, 1, 1], [], []>} : vector<16x256xbf16>, vector<256x128xbf16>, vector<16x128xf32> -> vector<16x128xf32>
    %c0_21 = arith.constant 0 : index
    %c0_22 = arith.constant 0 : index
    %27 = vector.load %arg9[%c0_21, %c0_22] : memref<1x128xf32, #tpu.memory_space<vmem>>, vector<1x128xf32>
    %28 = vector.broadcast %27 : vector<1x128xf32> to vector<16x128xf32>
    %29 = arith.addf %26, %28 : vector<16x128xf32>
    %c0_23 = arith.constant 0 : index
    %c0_24 = arith.constant 0 : index
    %30 = vector.load %arg10[%c0_23, %c0_24] : memref<16x128xf32, #tpu.memory_space<vmem>>, vector<16x128xf32>
    tpu.vector_store %arg10[%c0_23, %c0_24], %29 {strides = array<i32>} : memref<16x128xf32, #tpu.memory_space<vmem>>, vector<16x128xf32>,
    return
  }
  func.func @transform_0(%arg0: i32) -> (i32, i32) {
    %c0_i32 = arith.constant 0 : i32
    %c0_i32_0 = arith.constant 0 : i32
    return %arg0, %c0_i32 : i32, i32
  }
  func.func @transform_1(%arg0: i32) -> (i32, i32) {
    %c0_i32 = arith.constant 0 : i32
    %c0_i32_0 = arith.constant 0 : i32
    %c0_i32_1 = arith.constant 0 : i32
    return %c0_i32, %c0_i32_0 : i32, i32
  }
  func.func @transform_2(%arg0: i32) -> (i32, i32) {
    %c0_i32 = arith.constant 0 : i32
    %c0_i32_0 = arith.constant 0 : i32
    %c0_i32_1 = arith.constant 0 : i32
    return %c0_i32, %c0_i32_0 : i32, i32
  }
  func.func @transform_3(%arg0: i32) -> (i32, i32) {
    %c0_i32 = arith.constant 0 : i32
    %c0_i32_0 = arith.constant 0 : i32
    %c0_i32_1 = arith.constant 0 : i32
    return %c0_i32, %c0_i32_0 : i32, i32
  }
  func.func @transform_4(%arg0: i32) -> (i32, i32) {
    %c0_i32 = arith.constant 0 : i32
    %c0_i32_0 = arith.constant 0 : i32
    %c0_i32_1 = arith.constant 0 : i32
    return %c0_i32, %c0_i32_0 : i32, i32
  }
  func.func @transform_5(%arg0: i32) -> (i32, i32) {
    %c0_i32 = arith.constant 0 : i32
    %c0_i32_0 = arith.constant 0 : i32
    %c0_i32_1 = arith.constant 0 : i32
    return %c0_i32, %c0_i32_0 : i32, i32
  }
  func.func @transform_6(%arg0: i32) -> (i32, i32) {
    %c0_i32 = arith.constant 0 : i32
    %c0_i32_0 = arith.constant 0 : i32
    %c0_i32_1 = arith.constant 0 : i32
    return %c0_i32, %c0_i32_0 : i32, i32
  }
  func.func @transform_7(%arg0: i32) -> (i32, i32) {
    %c0_i32 = arith.constant 0 : i32
    %c0_i32_0 = arith.constant 0 : i32
    %c0_i32_1 = arith.constant 0 : i32
    return %c0_i32, %c0_i32_0 : i32, i32
  }
  func.func @transform_8(%arg0: i32) -> (i32, i32) {
    %c0_i32 = arith.constant 0 : i32
    %c0_i32_0 = arith.constant 0 : i32
    %c0_i32_1 = arith.constant 0 : i32
    return %c0_i32, %c0_i32_0 : i32, i32
  }
  func.func @transform_9(%arg0: i32) -> (i32, i32) {
    %c0_i32 = arith.constant 0 : i32
    %c0_i32_0 = arith.constant 0 : i32
    return %arg0, %c0_i32 : i32, i32
  }
}

</mosaic_0001>

<llo_original>
// kernel: sharelock_mlp_pallas.1
$region0: #{sharelock_mlp_pallas.1}
  #allocation0 [shape = 'u32[]', space=smem, size = 0x4, offset = 0x4, fixed_abs, tag = 'smem constant byte address 0x4 - core index']
  #allocation1 [shape = 'u32[144,128]{1,0:T(1,128)}', space=vmem, size = 0x12000, scoped, tag = 'internal scratch']
  %s0 = inlined_call_operand.vmem [shape: bf16[32,128], index: 0, kind: input, shape index: {}]
  %s1 = inlined_call_operand.vmem [shape: bf16[128,256], index: 1, kind: input, shape index: {}]
  %s2 = inlined_call_operand.vmem [shape: f32[1,256], index: 2, kind: input, shape index: {}]
  %s3 = inlined_call_operand.vmem [shape: bf16[256,256], index: 3, kind: input, shape index: {}]
  %s4 = inlined_call_operand.vmem [shape: f32[1,256], index: 4, kind: input, shape index: {}]
  %s5 = inlined_call_operand.vmem [shape: bf16[256,256], index: 5, kind: input, shape index: {}]
  %s6 = inlined_call_operand.vmem [shape: f32[1,256], index: 6, kind: input, shape index: {}]
  %s7 = inlined_call_operand.vmem [shape: bf16[256,128], index: 7, kind: input, shape index: {}]
  %s8 = inlined_call_operand.vmem [shape: f32[1,128], index: 8, kind: input, shape index: {}]
  %s9 = inlined_call_operand.hbm [shape: f32[32,128], index: 9, kind: output, shape index: {}]
  %s10 = sld [smem:[#allocation0]]
  $region69: #{sharelock_mlp_pallas.1} parent=0
    _
  %s12 = ssub.s32 1, %s10
  %s13 = scalar_select 0, %s12, %s10
  $region1: #{sharelock_mlp_pallas.1} parent=0
    #allocation2 [shape = 'u8[16384]{0}', space=vmem, size = 0x4000, scoped, tag = 'output window, operand 0']
    #allocation3 [shape = 's32[2]{0}', space=sflag, size = 0x8, scoped, tag = 'scoped memory for sharelock_mlp_pallas.1']
    %14 = vsyncpa [#allocation3], 0
    %s15 = scalar_lea.sflag [#allocation3], 1
    %16 = vsyncpa %s15, 0
    loop: start=0, step=1, limit=4
    $region2: #{sharelock_mlp_pallas.1} parent=1 // loop_pre_header
      _
    $region3: #{sharelock_mlp_pallas.1} parent=1 // loop_header
      %s18 = sphi 0, %s22
      %p19 = scmp.ge.s32.totalorder %s18, 4
      %s28 = sphi 0, %s30
      %s31 = sphi 0, %s28
      %s32 = sphi 0, %s31
      %s48 = sphi 0, %s32
      %s52 = sphi 0, %s52
      %s54 = sphi 0, %s52
      %s55 = sphi 0, %s54
      %s69 = sphi 0, %s55
      %s73 = sphi 0, %s73
      %s75 = sphi 0, %s73
      %s76 = sphi 0, %s75
      %s90 = sphi 0, %s76
      %s94 = sphi 0, %s94
      %s96 = sphi 0, %s94
      %s97 = sphi 0, %s96
      %s111 = sphi 0, %s97
      %s115 = sphi 0, %s115
      %s117 = sphi 0, %s115
      %s118 = sphi 0, %s117
      %s132 = sphi 0, %s118
      %s136 = sphi 0, %s136
      %s138 = sphi 0, %s136
      %s139 = sphi 0, %s138
      %s153 = sphi 0, %s139
      %s157 = sphi 0, %s157
      %s159 = sphi 0, %s157
      %s160 = sphi 0, %s159
      %s174 = sphi 0, %s160
      %s178 = sphi 0, %s178
      %s180 = sphi 0, %s178
      %s181 = sphi 0, %s180
      %s195 = sphi 0, %s181
      %s199 = sphi 0, %s199
      %s201 = sphi 0, %s199
      %s202 = sphi 0, %s201
      %s216 = sphi 0, %s202
      %s222 = sphi 0, %s224
      %s225 = sphi 0, %s222
      %s226 = sphi 0, %s225
      %s242 = sphi 0, %s226
    $region4: #{sharelock_mlp_pallas.1} parent=1 // loop_header_branch
      %21 = sbr.rel (%p19) target = $region8
    $region5: #{sharelock_mlp_pallas.1} parent=1 // loop_body
      %s23 = ssub.s32 %s18, 1
      %s24 = ssub.s32 %s18, 2
      %s25 = sadd.s32 %s18, 1
      %s26 = ssub.s32 %s18, %s25
      %p27 = scmp.eq.s32.totalorder %s26, 0
      %s29 = sadd.s32 %s28, 1
      %s30 = scalar_select %p27, %s28, %s29
      %p33 = pneg %p27
      %p34 = scmp.eq.s32.totalorder %s18, 1
      %p35 = por %p33, %p34
      %p36 = scmp.ne.s32.totalorder %s28, %s31
      %p37 = scmp.eq.s32.totalorder %s18, 0
      %p38 = por %p36, %p37
      %p39 = scmp.ne.s32.totalorder %s28, %s31
      %p40 = scmp.eq.s32.totalorder %s23, 1
      %p41 = por %p39, %p40
      %p42 = scmp.ne.s32.totalorder %s31, %s32
      %p43 = scmp.eq.s32.totalorder %s23, 0
      %p44 = por %p42, %p43
      %p45 = scmp.ne.s32.totalorder %s31, %s32
      %p46 = scmp.eq.s32.totalorder %s24, 1
      %p47 = por %p45, %p46
      %p49 = scmp.ne.s32.totalorder %s32, %s48
      %p50 = scmp.eq.s32.totalorder %s24, 0
      %p51 = por %p49, %p50
      %s53 = sadd.s32 %s52, 1
      %p56 = scmp.eq.s32.totalorder %s18, 1
      %p57 = scmp.ne.s32.totalorder %s52, %s54
      %p58 = scmp.eq.s32.totalorder %s18, 0
      %p59 = por %p57, %p58
      %p60 = scmp.ne.s32.totalorder %s52, %s54
      %p61 = scmp.eq.s32.totalorder %s23, 1
      %p62 = por %p60, %p61
      %p63 = scmp.ne.s32.totalorder %s54, %s55
      %p64 = scmp.eq.s32.totalorder %s23, 0
      %p65 = por %p63, %p64
      %p66 = scmp.ne.s32.totalorder %s54, %s55
      %p67 = scmp.eq.s32.totalorder %s24, 1
      %p68 = por %p66, %p67
      %p70 = scmp.ne.s32.totalorder %s55, %s69
      %p71 = scmp.eq.s32.totalorder %s24, 0
      %p72 = por %p70, %p71
      %s74 = sadd.s32 %s73, 1
      %p77 = scmp.eq.s32.totalorder %s18, 1
      %p78 = scmp.ne.s32.totalorder %s73, %s75
      %p79 = scmp.eq.s32.totalorder %s18, 0
      %p80 = por %p78, %p79
      %p81 = scmp.ne.s32.totalorder %s73, %s75
      %p82 = scmp.eq.s32.totalorder %s23, 1
      %p83 = por %p81, %p82
      %p84 = scmp.ne.s32.totalorder %s75, %s76
      %p85 = scmp.eq.s32.totalorder %s23, 0
      %p86 = por %p84, %p85
      %p87 = scmp.ne.s32.totalorder %s75, %s76
      %p88 = scmp.eq.s32.totalorder %s24, 1
      %p89 = por %p87, %p88
      %p91 = scmp.ne.s32.totalorder %s76, %s90
      %p92 = scmp.eq.s32.totalorder %s24, 0
      %p93 = por %p91, %p92
      %s95 = sadd.s32 %s94, 1
      %p98 = scmp.eq.s32.totalorder %s18, 1
      %p99 = scmp.ne.s32.totalorder %s94, %s96
      %p100 = scmp.eq.s32.totalorder %s18, 0
      %p101 = por %p99, %p100
      %p102 = scmp.ne.s32.totalorder %s94, %s96
      %p103 = scmp.eq.s32.totalorder %s23, 1
      %p104 = por %p102, %p103
      %p105 = scmp.ne.s32.totalorder %s96, %s97
      %p106 = scmp.eq.s32.totalorder %s23, 0
      %p107 = por %p105, %p106
      %p108 = scmp.ne.s32.totalorder %s96, %s97
      %p109 = scmp.eq.s32.totalorder %s24, 1
      %p110 = por %p108, %p109
      %p112 = scmp.ne.s32.totalorder %s97, %s111
      %p113 = scmp.eq.s32.totalorder %s24, 0
      %p114 = por %p112, %p113
      %s116 = sadd.s32 %s115, 1
      %p119 = scmp.eq.s32.totalorder %s18, 1
      %p120 = scmp.ne.s32.totalorder %s115, %s117
      %p121 = scmp.eq.s32.totalorder %s18, 0
      %p122 = por %p120, %p121
      %p123 = scmp.ne.s32.totalorder %s115, %s117
      %p124 = scmp.eq.s32.totalorder %s23, 1
      %p125 = por %p123, %p124
      %p126 = scmp.ne.s32.totalorder %s117, %s118
      %p127 = scmp.eq.s32.totalorder %s23, 0
      %p128 = por %p126, %p127
      %p129 = scmp.ne.s32.totalorder %s117, %s118
      %p130 = scmp.eq.s32.totalorder %s24, 1
      %p131 = por %p129, %p130
      %p133 = scmp.ne.s32.totalorder %s118, %s132
      %p134 = scmp.eq.s32.totalorder %s24, 0
      %p135 = por %p133, %p134
      %s137 = sadd.s32 %s136, 1
      %p140 = scmp.eq.s32.totalorder %s18, 1
      %p141 = scmp.ne.s32.totalorder %s136, %s138
      %p142 = scmp.eq.s32.totalorder %s18, 0
      %p143 = por %p141, %p142
      %p144 = scmp.ne.s32.totalorder %s136, %s138
      %p145 = scmp.eq.s32.totalorder %s23, 1
      %p146 = por %p144, %p145
      %p147 = scmp.ne.s32.totalorder %s138, %s139
      %p148 = scmp.eq.s32.totalorder %s23, 0
      %p149 = por %p147, %p148
      %p150 = scmp.ne.s32.totalorder %s138, %s139
      %p151 = scmp.eq.s32.totalorder %s24, 1
      %p152 = por %p150, %p151
      %p154 = scmp.ne.s32.totalorder %s139, %s153
      %p155 = scmp.eq.s32.totalorder %s24, 0
      %p156 = por %p154, %p155
      %s158 = sadd.s32 %s157, 1
      %p161 = scmp.eq.s32.totalorder %s18, 1
      %p162 = scmp.ne.s32.totalorder %s157, %s159
      %p163 = scmp.eq.s32.totalorder %s18, 0
      %p164 = por %p162, %p163
      %p165 = scmp.ne.s32.totalorder %s157, %s159
      %p166 = scmp.eq.s32.totalorder %s23, 1
      %p167 = por %p165, %p166
      %p168 = scmp.ne.s32.totalorder %s159, %s160
      %p169 = scmp.eq.s32.totalorder %s23, 0
      %p170 = por %p168, %p169
      %p171 = scmp.ne.s32.totalorder %s159, %s160
      %p172 = scmp.eq.s32.totalorder %s24, 1
      %p173 = por %p171, %p172
      %p175 = scmp.ne.s32.totalorder %s160, %s174
      %p176 = scmp.eq.s32.totalorder %s24, 0
      %p177 = por %p175, %p176
      %s179 = sadd.s32 %s178, 1
      %p182 = scmp.eq.s32.totalorder %s18, 1
      %p183 = scmp.ne.s32.totalorder %s178, %s180
      %p184 = scmp.eq.s32.totalorder %s18, 0
      %p185 = por %p183, %p184
      %p186 = scmp.ne.s32.totalorder %s178, %s180
      %p187 = scmp.eq.s32.totalorder %s23, 1
      %p188 = por %p186, %p187
      %p189 = scmp.ne.s32.totalorder %s180, %s181
      %p190 = scmp.eq.s32.totalorder %s23, 0
      %p191 = por %p189, %p190
      %p192 = scmp.ne.s32.totalorder %s180, %s181
      %p193 = scmp.eq.s32.totalorder %s24, 1
      %p194 = por %p192, %p193
      %p196 = scmp.ne.s32.totalorder %s181, %s195
      %p197 = scmp.eq.s32.totalorder %s24, 0
      %p198 = por %p196, %p197
      %s200 = sadd.s32 %s199, 1
      %p203 = scmp.eq.s32.totalorder %s18, 1
      %p204 = scmp.ne.s32.totalorder %s199, %s201
      %p205 = scmp.eq.s32.totalorder %s18, 0
      %p206 = por %p204, %p205
      %p207 = scmp.ne.s32.totalorder %s199, %s201
      %p208 = scmp.eq.s32.totalorder %s23, 1
      %p209 = por %p207, %p208
      %p210 = scmp.ne.s32.totalorder %s201, %s202
      %p211 = scmp.eq.s32.totalorder %s23, 0
      %p212 = por %p210, %p211
      %p213 = scmp.ne.s32.totalorder %s201, %s202
      %p214 = scmp.eq.s32.totalorder %s24, 1
      %p215 = por %p213, %p214
      %p217 = scmp.ne.s32.totalorder %s202, %s216
      %p218 = scmp.eq.s32.totalorder %s24, 0
      %p219 = por %p217, %p218
      %s220 = ssub.s32 %s18, %s25
      %p221 = scmp.eq.s32.totalorder %s220, 0
      %s223 = sadd.s32 %s222, 1
      %s224 = scalar_select %p221, %s222, %s223
      %p227 = pneg %p221
      %p228 = scmp.eq.s32.totalorder %s18, 1
      %p229 = por %p227, %p228
      %p230 = scmp.ne.s32.totalorder %s222, %s225
      %p231 = scmp.eq.s32.totalorder %s18, 0
      %p232 = por %p230, %p231
      %p233 = scmp.ne.s32.totalorder %s222, %s225
      %p234 = scmp.eq.s32.totalorder %s23, 1
      %p235 = por %p233, %p234
      %p236 = scmp.ne.s32.totalorder %s225, %s226
      %p237 = scmp.eq.s32.totalorder %s23, 0
      %p238 = por %p236, %p237
      %p239 = scmp.ne.s32.totalorder %s225, %s226
      %p240 = scmp.eq.s32.totalorder %s24, 1
      %p241 = por %p239, %p240
      %p243 = scmp.ne.s32.totalorder %s226, %s242
      %p244 = scmp.eq.s32.totalorder %s24, 0
      %p245 = por %p243, %p244
      %p246 = scmp.le.s32.totalorder 1, %s18
      %p247 = scmp.lt.s32.totalorder %s18, 3
      %p248 = pnand %p246, %p247
      %p249 = pneg %p248
      // Predicated region
      $region9: #{sharelock_mlp_pallas.1} parent=5 // pred_check
        _
      $region10: #{sharelock_mlp_pallas.1} parent=5 // pred_check_branch
        %251 = sbr.rel (%p248) target = $region12
      $region11: #{sharelock_mlp_pallas.1} parent=5 // pred_region
        %s252 = ssub.s32 %s18, 1
        // Predicated region
        $region13: #{sharelock_mlp_pallas.1} parent=11 // pred_check
          %p253 = pneg %p65
        $region14: #{sharelock_mlp_pallas.1} parent=11 // pred_check_branch
          %255 = sbr.rel (%p253) target = $region16
        $region15: #{sharelock_mlp_pallas.1} parent=11 // pred_region
          _
        $region16: #{sharelock_mlp_pallas.1} parent=11 // pred_fallthru
          _
        // Predicated region
        $region17: #{sharelock_mlp_pallas.1} parent=11 // pred_check
          %p256 = pneg %p86
        $region18: #{sharelock_mlp_pallas.1} parent=11 // pred_check_branch
          %258 = sbr.rel (%p256) target = $region20
        $region19: #{sharelock_mlp_pallas.1} parent=11 // pred_region
          _
        $region20: #{sharelock_mlp_pallas.1} parent=11 // pred_fallthru
          _
        // Predicated region
        $region21: #{sharelock_mlp_pallas.1} parent=11 // pred_check
          %p259 = pneg %p107
        $region22: #{sharelock_mlp_pallas.1} parent=11 // pred_check_branch
          %261 = sbr.rel (%p259) target = $region24
        $region23: #{sharelock_mlp_pallas.1} parent=11 // pred_region
          _
        $region24: #{sharelock_mlp_pallas.1} parent=11 // pred_fallthru
          _
        // Predicated region
        $region25: #{sharelock_mlp_pallas.1} parent=11 // pred_check
          %p262 = pneg %p128
        $region26: #{sharelock_mlp_pallas.1} parent=11 // pred_check_branch
          %264 = sbr.rel (%p262) target = $region28
        $region27: #{sharelock_mlp_pallas.1} parent=11 // pred_region
          _
        $region28: #{sharelock_mlp_pallas.1} parent=11 // pred_fallthru
          _
        // Predicated region
        $region29: #{sharelock_mlp_pallas.1} parent=11 // pred_check
          %p265 = pneg %p149
        $region30: #{sharelock_mlp_pallas.1} parent=11 // pred_check_branch
          %267 = sbr.rel (%p265) target = $region32
        $region31: #{sharelock_mlp_pallas.1} parent=11 // pred_region
          _
        $region32: #{sharelock_mlp_pallas.1} parent=11 // pred_fallthru
          _
        // Predicated region
        $region33: #{sharelock_mlp_pallas.1} parent=11 // pred_check
          %p268 = pneg %p170
        $region34: #{sharelock_mlp_pallas.1} parent=11 // pred_check_branch
          %270 = sbr.rel (%p268) target = $region36
        $region35: #{sharelock_mlp_pallas.1} parent=11 // pred_region
          _
        $region36: #{sharelock_mlp_pallas.1} parent=11 // pred_fallthru
          _
        // Predicated region
        $region37: #{sharelock_mlp_pallas.1} parent=11 // pred_check
          %p271 = pneg %p191
        $region38: #{sharelock_mlp_pallas.1} parent=11 // pred_check_branch
          %273 = sbr.rel (%p271) target = $region40
        $region39: #{sharelock_mlp_pallas.1} parent=11 // pred_region
          _
        $region40: #{sharelock_mlp_pallas.1} parent=11 // pred_fallthru
          _
        // Predicated region
        $region41: #{sharelock_mlp_pallas.1} parent=11 // pred_check
          %p274 = pneg %p212
        $region42: #{sharelock_mlp_pallas.1} parent=11 // pred_check_branch
          %276 = sbr.rel (%p274) target = $region44
        $region43: #{sharelock_mlp_pallas.1} parent=11 // pred_region
          _
        $region44: #{sharelock_mlp_pallas.1} parent=11 // pred_fallthru
          _
      $region12: #{sharelock_mlp_pallas.1} parent=5 // pred_fallthru
        _
      %p277 = scmp.lt.s32.totalorder %s18, 2
      // Predicated region
      $region45: #{sharelock_mlp_pallas.1} parent=5 // pred_check
        %p278 = pneg %p277
      $region46: #{sharelock_mlp_pallas.1} parent=5 // pred_check_branch
        %280 = sbr.rel (%p278) target = $region48
      $region47: #{sharelock_mlp_pallas.1} parent=5 // pred_region
        // Predicated region
        $region49: #{sharelock_mlp_pallas.1} parent=47 // pred_check
          %p281 = pneg %p38
        $region50: #{sharelock_mlp_pallas.1} parent=47 // pred_check_branch
          %283 = sbr.rel (%p281) target = $region52
        $region51: #{sharelock_mlp_pallas.1} parent=47 // pred_region
          %s284 = smul.u32 2, %s18
          %p285 = scmp.lt.s32.totalorder %s284, 3
          %s286 = scalar_select %p285, %s284, 3
          %s287 = smul.addr %s286, 4
          %s288 = scalar_lea.vmem %s0, %s287
          %s289 = smul.u32 2, %s18
        $region52: #{sharelock_mlp_pallas.1} parent=47 // pred_fallthru
          _
      $region48: #{sharelock_mlp_pallas.1} parent=5 // pred_fallthru
        _
      %p290 = scmp.le.s32.totalorder 1, %s18
      %p291 = scmp.lt.s32.totalorder %s18, 3
      %p292 = pnand %p290, %p291
      %p293 = pneg %p292
      // Predicated region
      $region53: #{sharelock_mlp_pallas.1} parent=5 // pred_check
        _
      $region54: #{sharelock_mlp_pallas.1} parent=5 // pred_check_branch
        %295 = sbr.rel (%p292) target = $region56
      $region55: #{sharelock_mlp_pallas.1} parent=5 // pred_region
        %s296 = ssub.s32 %s18, 1
        %s297 = smul.u32 2, %s23
        %p298 = scmp.lt.s32.totalorder %s297, 3
        %s299 = scalar_select %p298, %s297, 3
        %s300 = smul.addr %s299, 4
        %s301 = scalar_lea.vmem %s0, %s300
        %p302 = pneg %p44
        %p303 = pneg %p41
        %p304 = pneg %p65
        %p305 = pneg %p62
        %p306 = pneg %p86
        %p307 = pneg %p83
        %p308 = pneg %p107
        %p309 = pneg %p104
        %p310 = pneg %p128
        %p311 = pneg %p125
        %p312 = pneg %p149
        %p313 = pneg %p146
        %p314 = pneg %p170
        %p315 = pneg %p167
        %p316 = pneg %p191
        %p317 = pneg %p188
        %p318 = pneg %p212
        %p319 = pneg %p209
        %p320 = pneg %p238
        %p321 = pneg %p235
        %s322 = sand.u32 %s225, 1
        %s323 = scalar_lea.sflag [#allocation3], %s322
        %s324 = sand.u32 %s225, 1
        %s325 = smul.addr %s324, 16
        %s326 = scalar_lea.vmem [#allocation2], %s325
        %s327 = smul.u32 2, %s23
        %p328 = scmp.lt.s32.totalorder %s327, 3
        %s329 = scalar_select %p328, %s327, 3
        %s330 = smul.addr %s329, 4
        %s331 = scalar_lea.vmem %s0, %s330
        %s332 = smul.u32 2, %s23
        %s333 = smul.u32 2, %s23
        %v335 = vld [vmem:[%s331] sm:$0xf]
        %v336 = vld [vmem:[%s331 + $0x4] sm:$0xf]
        %v337 = vld [vmem:[%s1] sm:$0xff]
        %v338 = vld [vmem:[%s1 + $0x8] sm:$0xff]
        %v339 = vld [vmem:[%s1 + $0x10] sm:$0xff]
        %v340 = vld [vmem:[%s1 + $0x18] sm:$0xff]
        %v341 = vld [vmem:[%s1 + $0x20] sm:$0xff]
        %v342 = vld [vmem:[%s1 + $0x28] sm:$0xff]
        %v343 = vld [vmem:[%s1 + $0x30] sm:$0xff]
        %v344 = vld [vmem:[%s1 + $0x38] sm:$0xff]
        %v345 = vld [vmem:[%s1 + $0x40] sm:$0xff]
        %v346 = vld [vmem:[%s1 + $0x48] sm:$0xff]
        %v347 = vld [vmem:[%s1 + $0x50] sm:$0xff]
        %v348 = vld [vmem:[%s1 + $0x58] sm:$0xff]
        %v349 = vld [vmem:[%s1 + $0x60] sm:$0xff]
        %v350 = vld [vmem:[%s1 + $0x68] sm:$0xff]
        %v351 = vld [vmem:[%s1 + $0x70] sm:$0xff]
        %v352 = vld [vmem:[%s1 + $0x78] sm:$0xff]
        %v353 = vld [vmem:[%s2] sm:$0x3]
        %v355 = vlaneseq
        %v356 = vshrl.u32 %v355, 7
        %v357 = vsub.s32 0, %v356
        %v358 = vrot.slane %v353, %v357
        %v359 = vlaneseq
        %v360 = vshrl.u32 %v359, 7
        %v361 = vsub.s32 1, %v360
        %v362 = vrot.slane %v353, %v361
        %v367 = vunpack.c.l.b16 %v335
        %v368 = vunpack.c.l.b16 %v336
        %v369 = vpack.c.b16 %v368, %v367
        %v387 = vunpack.c.l.b16 %v337
        %v388 = vunpack.c.h.b16 %v337
        %v389 = vunpack.c.l.b16 %v338
        %v390 = vunpack.c.h.b16 %v338
        %v391 = vunpack.c.l.b16 %v339
        %v392 = vunpack.c.h.b16 %v339
        %v393 = vunpack.c.l.b16 %v340
        %v394 = vunpack.c.h.b16 %v340
        %v395 = vunpack.c.l.b16 %v341
        %v396 = vunpack.c.h.b16 %v341
        %v397 = vunpack.c.l.b16 %v342
        %v398 = vunpack.c.h.b16 %v342
        %v399 = vunpack.c.l.b16 %v343
        %v400 = vunpack.c.h.b16 %v343
        %v401 = vunpack.c.l.b16 %v344
        %v402 = vunpack.c.h.b16 %v344
        %v403 = vunpack.c.l.b16 %v345
        %v404 = vunpack.c.h.b16 %v345
        %v405 = vunpack.c.l.b16 %v346
        %v406 = vunpack.c.h.b16 %v346
        %v407 = vunpack.c.l.b16 %v347
        %v408 = vunpack.c.h.b16 %v347
        %v409 = vunpack.c.l.b16 %v348
        %v410 = vunpack.c.h.b16 %v348
        %v411 = vunpack.c.l.b16 %v349
        %v412 = vunpack.c.h.b16 %v349
        %v413 = vunpack.c.l.b16 %v350
        %v414 = vunpack.c.h.b16 %v350
        %v415 = vunpack.c.l.b16 %v351
        %v416 = vunpack.c.h.b16 %v351
        %v417 = vunpack.c.l.b16 %v352
        %v418 = vunpack.c.h.b16 %v352
        %v419 = vpack.c.b16 %v389, %v387
        %v420 = vpack.c.b16 %v390, %v388
        %v421 = vpack.c.b16 %v393, %v391
        %v422 = vpack.c.b16 %v394, %v392
        %v423 = vpack.c.b16 %v397, %v395
        %v424 = vpack.c.b16 %v398, %v396
        %v425 = vpack.c.b16 %v401, %v399
        %v426 = vpack.c.b16 %v402, %v400
        %v427 = vpack.c.b16 %v405, %v403
        %v428 = vpack.c.b16 %v406, %v404
        %v429 = vpack.c.b16 %v409, %v407
        %v430 = vpack.c.b16 %v410, %v408
        %v431 = vpack.c.b16 %v413, %v411
        %v432 = vpack.c.b16 %v414, %v412
        %v433 = vpack.c.b16 %v417, %v415
        %v434 = vpack.c.b16 %v418, %v416
        %451 = vmatprep.subr.bf16.mxu0 %v420
        %452 = vmatpush1.bf16.msra.mxu0 %v419
        %453 = vmatprep.subr.bf16.mxu0 %v422
        %454 = vmatpush1.bf16.msra.mxu0 %v421
        %455 = vmatprep.subr.bf16.mxu0 %v424
        %456 = vmatpush1.bf16.msra.mxu0 %v423
        %457 = vmatprep.subr.bf16.mxu0 %v426
        %458 = vmatpush1.bf16.msra.mxu0 %v425
        %459 = vmatprep.subr.bf16.mxu0 %v428
        %460 = vmatpush1.bf16.msra.mxu0 %v427
        %461 = vmatprep.subr.bf16.mxu0 %v430
        %462 = vmatpush1.bf16.msra.mxu0 %v429
        %463 = vmatprep.subr.bf16.mxu0 %v432
        %464 = vmatpush1.bf16.msra.mxu0 %v431
        %465 = vmatprep.subr.bf16.mxu0 %v434
        %466 = vmatpush1.bf16.msra.mxu0 %v433
        %467 = vmatprep.subr.bf16.mxu0 0
        %468 = vmatpush1.bf16.msra.mxu0 0
        %469 = vmatprep.subr.bf16.mxu0 0
        %470 = vmatpush1.bf16.msra.mxu0 0
        %471 = vmatprep.subr.bf16.mxu0 0
        %472 = vmatpush1.bf16.msra.mxu0 0
        %473 = vmatprep.subr.bf16.mxu0 0
        %474 = vmatpush1.bf16.msra.mxu0 0
        %475 = vmatprep.subr.bf16.mxu0 0
        %476 = vmatpush1.bf16.msra.mxu0 0
        %477 = vmatprep.subr.bf16.mxu0 0
        %478 = vmatpush1.bf16.msra.mxu0 0
        %479 = vmatprep.subr.bf16.mxu0 0
        %480 = vmatpush1.bf16.msra.mxu0 0
        %481 = vmatprep.subr.bf16.mxu0 0
        %482 = vmatpush1.bf16.msra.mxu0 0
        %483 = vmatprep.mubr.bf16.mxu0 0
        %484 = vmatmul.mubr.bf16.gmra.mrb[0].mxu0 %v369
        %v485 = vpop.f32.mrb[0].mxu0
        %v486 = vadd.f32 %v358, %v485
        %v487 = vpop.f32.mrb[0].mxu0
        %v488 = vadd.f32 %v362, %v487
        %v489 = vpop.f32.mrb[0].mxu0
        %v490 = vadd.f32 %v358, %v489
        %v491 = vpop.f32.mrb[0].mxu0
        %v492 = vadd.f32 %v362, %v491
        %493 = vdwg.mxu0
        %v494 = vmax.f32 %v486, 0.0
        %v495 = vmax.f32 %v488, 0.0
        %v496 = vmax.f32 %v490, 0.0
        %v497 = vmax.f32 %v492, 0.0
        %v498 = vpack.c.bf16 %v496, %v494
        %v499 = vpack.c.bf16 %v497, %v495
        %v500 = vld [vmem:[%s3] sm:$0xff]
        %v501 = vld [vmem:[%s3 + $0x8] sm:$0xff]
        %v502 = vld [vmem:[%s3 + $0x10] sm:$0xff]
        %v503 = vld [vmem:[%s3 + $0x18] sm:$0xff]
        %v504 = vld [vmem:[%s3 + $0x20] sm:$0xff]
        %v505 = vld [vmem:[%s3 + $0x28] sm:$0xff]
        %v506 = vld [vmem:[%s3 + $0x30] sm:$0xff]
        %v507 = vld [vmem:[%s3 + $0x38] sm:$0xff]
        %v508 = vld [vmem:[%s3 + $0x40] sm:$0xff]
        %v509 = vld [vmem:[%s3 + $0x48] sm:$0xff]
        %v510 = vld [vmem:[%s3 + $0x50] sm:$0xff]
        %v511 = vld [vmem:[%s3 + $0x58] sm:$0xff]
        %v512 = vld [vmem:[%s3 + $0x60] sm:$0xff]
        %v513 = vld [vmem:[%s3 + $0x68] sm:$0xff]
        %v514 = vld [vmem:[%s3 + $0x70] sm:$0xff]
        %v515 = vld [vmem:[%s3 + $0x78] sm:$0xff]
        %v516 = vld [vmem:[%s3 + $0x80] sm:$0xff]
        %v517 = vld [vmem:[%s3 + $0x88] sm:$0xff]
        %v518 = vld [vmem:[%s3 + $0x90] sm:$0xff]
        %v519 = vld [vmem:[%s3 + $0x98] sm:$0xff]
        %v520 = vld [vmem:[%s3 + $0xa0] sm:$0xff]
        %v521 = vld [vmem:[%s3 + $0xa8] sm:$0xff]
        %v522 = vld [vmem:[%s3 + $0xb0] sm:$0xff]
        %v523 = vld [vmem:[%s3 + $0xb8] sm:$0xff]
        %v524 = vld [vmem:[%s3 + $0xc0] sm:$0xff]
        %v525 = vld [vmem:[%s3 + $0xc8] sm:$0xff]
        %v526 = vld [vmem:[%s3 + $0xd0] sm:$0xff]
        %v527 = vld [vmem:[%s3 + $0xd8] sm:$0xff]
        %v528 = vld [vmem:[%s3 + $0xe0] sm:$0xff]
        %v529 = vld [vmem:[%s3 + $0xe8] sm:$0xff]
        %v530 = vld [vmem:[%s3 + $0xf0] sm:$0xff]
        %v531 = vld [vmem:[%s3 + $0xf8] sm:$0xff]
        %v532 = vld [vmem:[%s4] sm:$0x3]
        %v534 = vlaneseq
        %v535 = vshrl.u32 %v534, 7
        %v536 = vsub.s32 0, %v535
        %v537 = vrot.slane %v532, %v536
        %v538 = vlaneseq
        %v539 = vshrl.u32 %v538, 7
        %v540 = vsub.s32 1, %v539
        %v541 = vrot.slane %v532, %v540
        %v576 = vunpack.c.l.b16 %v500
        %v577 = vunpack.c.h.b16 %v500
        %v578 = vunpack.c.l.b16 %v501
        %v579 = vunpack.c.h.b16 %v501
        %v580 = vunpack.c.l.b16 %v502
        %v581 = vunpack.c.h.b16 %v502
        %v582 = vunpack.c.l.b16 %v503
        %v583 = vunpack.c.h.b16 %v503
        %v584 = vunpack.c.l.b16 %v504
        %v585 = vunpack.c.h.b16 %v504
        %v586 = vunpack.c.l.b16 %v505
        %v587 = vunpack.c.h.b16 %v505
        %v588 = vunpack.c.l.b16 %v506
        %v589 = vunpack.c.h.b16 %v506
        %v590 = vunpack.c.l.b16 %v507
        %v591 = vunpack.c.h.b16 %v507
        %v592 = vunpack.c.l.b16 %v508
        %v593 = vunpack.c.h.b16 %v508
        %v594 = vunpack.c.l.b16 %v509
        %v595 = vunpack.c.h.b16 %v509
        %v596 = vunpack.c.l.b16 %v510
        %v597 = vunpack.c.h.b16 %v510
        %v598 = vunpack.c.l.b16 %v511
        %v599 = vunpack.c.h.b16 %v511
        %v600 = vunpack.c.l.b16 %v512
        %v601 = vunpack.c.h.b16 %v512
        %v602 = vunpack.c.l.b16 %v513
        %v603 = vunpack.c.h.b16 %v513
        %v604 = vunpack.c.l.b16 %v514
        %v605 = vunpack.c.h.b16 %v514
        %v606 = vunpack.c.l.b16 %v515
        %v607 = vunpack.c.h.b16 %v515
        %v608 = vunpack.c.l.b16 %v516
        %v609 = vunpack.c.h.b16 %v516
        %v610 = vunpack.c.l.b16 %v517
        %v611 = vunpack.c.h.b16 %v517
        %v612 = vunpack.c.l.b16 %v518
        %v613 = vunpack.c.h.b16 %v518
        %v614 = vunpack.c.l.b16 %v519
        %v615 = vunpack.c.h.b16 %v519
        %v616 = vunpack.c.l.b16 %v520
        %v617 = vunpack.c.h.b16 %v520
        %v618 = vunpack.c.l.b16 %v521
        %v619 = vunpack.c.h.b16 %v521
        %v620 = vunpack.c.l.b16 %v522
        %v621 = vunpack.c.h.b16 %v522
        %v622 = vunpack.c.l.b16 %v523
        %v623 = vunpack.c.h.b16 %v523
        %v624 = vunpack.c.l.b16 %v524
        %v625 = vunpack.c.h.b16 %v524
        %v626 = vunpack.c.l.b16 %v525
        %v627 = vunpack.c.h.b16 %v525
        %v628 = vunpack.c.l.b16 %v526
        %v629 = vunpack.c.h.b16 %v526
        %v630 = vunpack.c.l.b16 %v527
        %v631 = vunpack.c.h.b16 %v527
        %v632 = vunpack.c.l.b16 %v528
        %v633 = vunpack.c.h.b16 %v528
        %v634 = vunpack.c.l.b16 %v529
        %v635 = vunpack.c.h.b16 %v529
        %v636 = vunpack.c.l.b16 %v530
        %v637 = vunpack.c.h.b16 %v530
        %v638 = vunpack.c.l.b16 %v531
        %v639 = vunpack.c.h.b16 %v531
        %v640 = vpack.c.b16 %v578, %v576
        %v641 = vpack.c.b16 %v579, %v577
        %v642 = vpack.c.b16 %v582, %v580
        %v643 = vpack.c.b16 %v583, %v581
        %v644 = vpack.c.b16 %v586, %v584
        %v645 = vpack.c.b16 %v587, %v585
        %v646 = vpack.c.b16 %v590, %v588
        %v647 = vpack.c.b16 %v591, %v589
        %v648 = vpack.c.b16 %v594, %v592
        %v649 = vpack.c.b16 %v595, %v593
        %v650 = vpack.c.b16 %v598, %v596
        %v651 = vpack.c.b16 %v599, %v597
        %v652 = vpack.c.b16 %v602, %v600
        %v653 = vpack.c.b16 %v603, %v601
        %v654 = vpack.c.b16 %v606, %v604
        %v655 = vpack.c.b16 %v607, %v605
        %v656 = vpack.c.b16 %v610, %v608
        %v657 = vpack.c.b16 %v611, %v609
        %v658 = vpack.c.b16 %v614, %v612
        %v659 = vpack.c.b16 %v615, %v613
        %v660 = vpack.c.b16 %v618, %v616
        %v661 = vpack.c.b16 %v619, %v617
        %v662 = vpack.c.b16 %v622, %v620
        %v663 = vpack.c.b16 %v623, %v621
        %v664 = vpack.c.b16 %v626, %v624
        %v665 = vpack.c.b16 %v627, %v625
        %v666 = vpack.c.b16 %v630, %v628
        %v667 = vpack.c.b16 %v631, %v629
        %v668 = vpack.c.b16 %v634, %v632
        %v669 = vpack.c.b16 %v635, %v633
        %v670 = vpack.c.b16 %v638, %v636
        %v671 = vpack.c.b16 %v639, %v637
        %704 = vmatprep.subr.bf16.mxu0 %v641
        %705 = vmatpush1.bf16.msra.mxu0 %v640
        %706 = vmatprep.subr.bf16.mxu0 %v643
        %707 = vmatpush1.bf16.msra.mxu0 %v642
        %708 = vmatprep.subr.bf16.mxu0 %v645
        %709 = vmatpush1.bf16.msra.mxu0 %v644
        %710 = vmatprep.subr.bf16.mxu0 %v647
        %711 = vmatpush1.bf16.msra.mxu0 %v646
        %712 = vmatprep.subr.bf16.mxu0 %v649
        %713 = vmatpush1.bf16.msra.mxu0 %v648
        %714 = vmatprep.subr.bf16.mxu0 %v651
        %715 = vmatpush1.bf16.msra.mxu0 %v650
        %716 = vmatprep.subr.bf16.mxu0 %v653
        %717 = vmatpush1.bf16.msra.mxu0 %v652
        %718 = vmatprep.subr.bf16.mxu0 %v655
        %719 = vmatpush1.bf16.msra.mxu0 %v654
        %720 = vmatprep.subr.bf16.mxu0 %v657
        %721 = vmatpush1.bf16.msra.mxu0 %v656
        %722 = vmatprep.subr.bf16.mxu0 %v659
        %723 = vmatpush1.bf16.msra.mxu0 %v658
        %724 = vmatprep.subr.bf16.mxu0 %v661
        %725 = vmatpush1.bf16.msra.mxu0 %v660
        %726 = vmatprep.subr.bf16.mxu0 %v663
        %727 = vmatpush1.bf16.msra.mxu0 %v662
        %728 = vmatprep.subr.bf16.mxu0 %v665
        %729 = vmatpush1.bf16.msra.mxu0 %v664
        %730 = vmatprep.subr.bf16.mxu0 %v667
        %731 = vmatpush1.bf16.msra.mxu0 %v666
        %732 = vmatprep.subr.bf16.mxu0 %v669
        %733 = vmatpush1.bf16.msra.mxu0 %v668
        %734 = vmatprep.subr.bf16.mxu0 %v671
        %735 = vmatpush1.bf16.msra.mxu0 %v670
        %736 = vmatprep.mubr.bf16.mxu0 %v499
        %737 = vmatmul.mubr.bf16.gmra.mrb[0].mxu0 %v498
        %v738 = vpop.f32.mrb[0].mxu0
        %v739 = vadd.f32 %v537, %v738
        %v740 = vpop.f32.mrb[0].mxu0
        %v741 = vadd.f32 %v541, %v740
        %v742 = vpop.f32.mrb[0].mxu0
        %v743 = vadd.f32 %v537, %v742
        %v744 = vpop.f32.mrb[0].mxu0
        %v745 = vadd.f32 %v541, %v744
        %746 = vdwg.mxu0
        %v747 = vmax.f32 %v739, 0.0
        %v748 = vmax.f32 %v741, 0.0
        %v749 = vmax.f32 %v743, 0.0
        %v750 = vmax.f32 %v745, 0.0
        %v751 = vpack.c.bf16 %v749, %v747
        %v752 = vpack.c.bf16 %v750, %v748
        %v753 = vld [vmem:[%s5] sm:$0xff]
        %v754 = vld [vmem:[%s5 + $0x8] sm:$0xff]
        %v755 = vld [vmem:[%s5 + $0x10] sm:$0xff]
        %v756 = vld [vmem:[%s5 + $0x18] sm:$0xff]
        %v757 = vld [vmem:[%s5 + $0x20] sm:$0xff]
        %v758 = vld [vmem:[%s5 + $0x28] sm:$0xff]
        %v759 = vld [vmem:[%s5 + $0x30] sm:$0xff]
        %v760 = vld [vmem:[%s5 + $0x38] sm:$0xff]
        %v761 = vld [vmem:[%s5 + $0x40] sm:$0xff]
        %v762 = vld [vmem:[%s5 + $0x48] sm:$0xff]
        %v763 = vld [vmem:[%s5 + $0x50] sm:$0xff]
        %v764 = vld [vmem:[%s5 + $0x58] sm:$0xff]
        %v765 = vld [vmem:[%s5 + $0x60] sm:$0xff]
        %v766 = vld [vmem:[%s5 + $0x68] sm:$0xff]
        %v767 = vld [vmem:[%s5 + $0x70] sm:$0xff]
        %v768 = vld [vmem:[%s5 + $0x78] sm:$0xff]
        %v769 = vld [vmem:[%s5 + $0x80] sm:$0xff]
        %v770 = vld [vmem:[%s5 + $0x88] sm:$0xff]
        %v771 = vld [vmem:[%s5 + $0x90] sm:$0xff]
        %v772 = vld [vmem:[%s5 + $0x98] sm:$0xff]
        %v773 = vld [vmem:[%s5 + $0xa0] sm:$0xff]
        %v774 = vld [vmem:[%s5 + $0xa8] sm:$0xff]
        %v775 = vld [vmem:[%s5 + $0xb0] sm:$0xff]
        %v776 = vld [vmem:[%s5 + $0xb8] sm:$0xff]
        %v777 = vld [vmem:[%s5 + $0xc0] sm:$0xff]
        %v778 = vld [vmem:[%s5 + $0xc8] sm:$0xff]
        %v779 = vld [vmem:[%s5 + $0xd0] sm:$0xff]
        %v780 = vld [vmem:[%s5 + $0xd8] sm:$0xff]
        %v781 = vld [vmem:[%s5 + $0xe0] sm:$0xff]
        %v782 = vld [vmem:[%s5 + $0xe8] sm:$0xff]
        %v783 = vld [vmem:[%s5 + $0xf0] sm:$0xff]
        %v784 = vld [vmem:[%s5 + $0xf8] sm:$0xff]
        %v785 = vld [vmem:[%s6] sm:$0x3]
        %v787 = vlaneseq
        %v788 = vshrl.u32 %v787, 7
        %v789 = vsub.s32 0, %v788
        %v790 = vrot.slane %v785, %v789
        %v791 = vlaneseq
        %v792 = vshrl.u32 %v791, 7
        %v793 = vsub.s32 1, %v792
        %v794 = vrot.slane %v785, %v793
        %v829 = vunpack.c.l.b16 %v753
        %v830 = vunpack.c.h.b16 %v753
        %v831 = vunpack.c.l.b16 %v754
        %v832 = vunpack.c.h.b16 %v754
        %v833 = vunpack.c.l.b16 %v755
        %v834 = vunpack.c.h.b16 %v755
        %v835 = vunpack.c.l.b16 %v756
        %v836 = vunpack.c.h.b16 %v756
        %v837 = vunpack.c.l.b16 %v757
        %v838 = vunpack.c.h.b16 %v757
        %v839 = vunpack.c.l.b16 %v758
        %v840 = vunpack.c.h.b16 %v758
        %v841 = vunpack.c.l.b16 %v759
        %v842 = vunpack.c.h.b16 %v759
        %v843 = vunpack.c.l.b16 %v760
        %v844 = vunpack.c.h.b16 %v760
        %v845 = vunpack.c.l.b16 %v761
        %v846 = vunpack.c.h.b16 %v761
        %v847 = vunpack.c.l.b16 %v762
        %v848 = vunpack.c.h.b16 %v762
        %v849 = vunpack.c.l.b16 %v763
        %v850 = vunpack.c.h.b16 %v763
        %v851 = vunpack.c.l.b16 %v764
        %v852 = vunpack.c.h.b16 %v764
        %v853 = vunpack.c.l.b16 %v765
        %v854 = vunpack.c.h.b16 %v765
        %v855 = vunpack.c.l.b16 %v766
        %v856 = vunpack.c.h.b16 %v766
        %v857 = vunpack.c.l.b16 %v767
        %v858 = vunpack.c.h.b16 %v767
        %v859 = vunpack.c.l.b16 %v768
        %v860 = vunpack.c.h.b16 %v768
        %v861 = vunpack.c.l.b16 %v769
        %v862 = vunpack.c.h.b16 %v769
        %v863 = vunpack.c.l.b16 %v770
        %v864 = vunpack.c.h.b16 %v770
        %v865 = vunpack.c.l.b16 %v771
        %v866 = vunpack.c.h.b16 %v771
        %v867 = vunpack.c.l.b16 %v772
        %v868 = vunpack.c.h.b16 %v772
        %v869 = vunpack.c.l.b16 %v773
        %v870 = vunpack.c.h.b16 %v773
        %v871 = vunpack.c.l.b16 %v774
        %v872 = vunpack.c.h.b16 %v774
        %v873 = vunpack.c.l.b16 %v775
        %v874 = vunpack.c.h.b16 %v775
        %v875 = vunpack.c.l.b16 %v776
        %v876 = vunpack.c.h.b16 %v776
        %v877 = vunpack.c.l.b16 %v777
        %v878 = vunpack.c.h.b16 %v777
        %v879 = vunpack.c.l.b16 %v778
        %v880 = vunpack.c.h.b16 %v778
        %v881 = vunpack.c.l.b16 %v779
        %v882 = vunpack.c.h.b16 %v779
        %v883 = vunpack.c.l.b16 %v780
        %v884 = vunpack.c.h.b16 %v780
        %v885 = vunpack.c.l.b16 %v781
        %v886 = vunpack.c.h.b16 %v781
        %v887 = vunpack.c.l.b16 %v782
        %v888 = vunpack.c.h.b16 %v782
        %v889 = vunpack.c.l.b16 %v783
        %v890 = vunpack.c.h.b16 %v783
        %v891 = vunpack.c.l.b16 %v784
        %v892 = vunpack.c.h.b16 %v784
        %v893 = vpack.c.b16 %v831, %v829
        %v894 = vpack.c.b16 %v832, %v830
        %v895 = vpack.c.b16 %v835, %v833
        %v896 = vpack.c.b16 %v836, %v834
        %v897 = vpack.c.b16 %v839, %v837
        %v898 = vpack.c.b16 %v840, %v838
        %v899 = vpack.c.b16 %v843, %v841
        %v900 = vpack.c.b16 %v844, %v842
        %v901 = vpack.c.b16 %v847, %v845
        %v902 = vpack.c.b16 %v848, %v846
        %v903 = vpack.c.b16 %v851, %v849
        %v904 = vpack.c.b16 %v852, %v850
        %v905 = vpack.c.b16 %v855, %v853
        %v906 = vpack.c.b16 %v856, %v854
        %v907 = vpack.c.b16 %v859, %v857
        %v908 = vpack.c.b16 %v860, %v858
        %v909 = vpack.c.b16 %v863, %v861
        %v910 = vpack.c.b16 %v864, %v862
        %v911 = vpack.c.b16 %v867, %v865
        %v912 = vpack.c.b16 %v868, %v866
        %v913 = vpack.c.b16 %v871, %v869
        %v914 = vpack.c.b16 %v872, %v870
        %v915 = vpack.c.b16 %v875, %v873
        %v916 = vpack.c.b16 %v876, %v874
        %v917 = vpack.c.b16 %v879, %v877
        %v918 = vpack.c.b16 %v880, %v878
        %v919 = vpack.c.b16 %v883, %v881
        %v920 = vpack.c.b16 %v884, %v882
        %v921 = vpack.c.b16 %v887, %v885
        %v922 = vpack.c.b16 %v888, %v886
        %v923 = vpack.c.b16 %v891, %v889
        %v924 = vpack.c.b16 %v892, %v890
        %957 = vmatprep.subr.bf16.mxu0 %v894
        %958 = vmatpush1.bf16.msra.mxu0 %v893
        %959 = vmatprep.subr.bf16.mxu0 %v896
        %960 = vmatpush1.bf16.msra.mxu0 %v895
        %961 = vmatprep.subr.bf16.mxu0 %v898
        %962 = vmatpush1.bf16.msra.mxu0 %v897
        %963 = vmatprep.subr.bf16.mxu0 %v900
        %964 = vmatpush1.bf16.msra.mxu0 %v899
        %965 = vmatprep.subr.bf16.mxu0 %v902
        %966 = vmatpush1.bf16.msra.mxu0 %v901
        %967 = vmatprep.subr.bf16.mxu0 %v904
        %968 = vmatpush1.bf16.msra.mxu0 %v903
        %969 = vmatprep.subr.bf16.mxu0 %v906
        %970 = vmatpush1.bf16.msra.mxu0 %v905
        %971 = vmatprep.subr.bf16.mxu0 %v908
        %972 = vmatpush1.bf16.msra.mxu0 %v907
        %973 = vmatprep.subr.bf16.mxu0 %v910
        %974 = vmatpush1.bf16.msra.mxu0 %v909
        %975 = vmatprep.subr.bf16.mxu0 %v912
        %976 = vmatpush1.bf16.msra.mxu0 %v911
        %977 = vmatprep.subr.bf16.mxu0 %v914
        %978 = vmatpush1.bf16.msra.mxu0 %v913
        %979 = vmatprep.subr.bf16.mxu0 %v916
        %980 = vmatpush1.bf16.msra.mxu0 %v915
        %981 = vmatprep.subr.bf16.mxu0 %v918
        %982 = vmatpush1.bf16.msra.mxu0 %v917
        %983 = vmatprep.subr.bf16.mxu0 %v920
        %984 = vmatpush1.bf16.msra.mxu0 %v919
        %985 = vmatprep.subr.bf16.mxu0 %v922
        %986 = vmatpush1.bf16.msra.mxu0 %v921
        %987 = vmatprep.subr.bf16.mxu0 %v924
        %988 = vmatpush1.bf16.msra.mxu0 %v923
        %989 = vmatprep.mubr.bf16.mxu0 %v752
        %990 = vmatmul.mubr.bf16.gmra.mrb[0].mxu0 %v751
        %v991 = vpop.f32.mrb[0].mxu0
        %v992 = vadd.f32 %v790, %v991
        %v993 = vpop.f32.mrb[0].mxu0
        %v994 = vadd.f32 %v794, %v993
        %v995 = vpop.f32.mrb[0].mxu0
        %v996 = vadd.f32 %v790, %v995
        %v997 = vpop.f32.mrb[0].mxu0
        %v998 = vadd.f32 %v794, %v997
        %999 = vdwg.mxu0
        %v1000 = vmax.f32 %v992, 0.0
        %v1001 = vmax.f32 %v994, 0.0
        %v1002 = vmax.f32 %v996, 0.0
        %v1003 = vmax.f32 %v998, 0.0
        %v1004 = vpack.c.bf16 %v1002, %v1000
        %v1005 = vpack.c.bf16 %v1003, %v1001
        %v1006 = vld [vmem:[%s7] sm:$0xf]
        %v1007 = vld [vmem:[%s7 + $0x4] sm:$0xf]
        %v1008 = vld [vmem:[%s7 + $0x8] sm:$0xf]
        %v1009 = vld [vmem:[%s7 + $0xc] sm:$0xf]
        %v1010 = vld [vmem:[%s7 + $0x10] sm:$0xf]
        %v1011 = vld [vmem:[%s7 + $0x14] sm:$0xf]
        %v1012 = vld [vmem:[%s7 + $0x18] sm:$0xf]
        %v1013 = vld [vmem:[%s7 + $0x1c] sm:$0xf]
        %v1014 = vld [vmem:[%s7 + $0x20] sm:$0xf]
        %v1015 = vld [vmem:[%s7 + $0x24] sm:$0xf]
        %v1016 = vld [vmem:[%s7 + $0x28] sm:$0xf]
        %v1017 = vld [vmem:[%s7 + $0x2c] sm:$0xf]
        %v1018 = vld [vmem:[%s7 + $0x30] sm:$0xf]
        %v1019 = vld [vmem:[%s7 + $0x34] sm:$0xf]
        %v1020 = vld [vmem:[%s7 + $0x38] sm:$0xf]
        %v1021 = vld [vmem:[%s7 + $0x3c] sm:$0xf]
        %v1022 = vld [vmem:[%s7 + $0x40] sm:$0xf]
        %v1023 = vld [vmem:[%s7 + $0x44] sm:$0xf]
        %v1024 = vld [vmem:[%s7 + $0x48] sm:$0xf]
        %v1025 = vld [vmem:[%s7 + $0x4c] sm:$0xf]
        %v1026 = vld [vmem:[%s7 + $0x50] sm:$0xf]
        %v1027 = vld [vmem:[%s7 + $0x54] sm:$0xf]
        %v1028 = vld [vmem:[%s7 + $0x58] sm:$0xf]
        %v1029 = vld [vmem:[%s7 + $0x5c] sm:$0xf]
        %v1030 = vld [vmem:[%s7 + $0x60] sm:$0xf]
        %v1031 = vld [vmem:[%s7 + $0x64] sm:$0xf]
        %v1032 = vld [vmem:[%s7 + $0x68] sm:$0xf]
        %v1033 = vld [vmem:[%s7 + $0x6c] sm:$0xf]
        %v1034 = vld [vmem:[%s7 + $0x70] sm:$0xf]
        %v1035 = vld [vmem:[%s7 + $0x74] sm:$0xf]
        %v1036 = vld [vmem:[%s7 + $0x78] sm:$0xf]
        %v1037 = vld [vmem:[%s7 + $0x7c] sm:$0xf]
        %v1038 = vld [vmem:[%s8] sm:$0x1]
        %v1040 = vlaneseq
        %v1041 = vshrl.u32 %v1040, 7
        %v1042 = vsub.s32 0, %v1041
        %v1043 = vrot.slane %v1038, %v1042
        %v1077 = vunpack.c.l.b16 %v1006
        %v1078 = vunpack.c.l.b16 %v1007
        %v1079 = vunpack.c.l.b16 %v1008
        %v1080 = vunpack.c.l.b16 %v1009
        %v1081 = vunpack.c.l.b16 %v1010
        %v1082 = vunpack.c.l.b16 %v1011
        %v1083 = vunpack.c.l.b16 %v1012
        %v1084 = vunpack.c.l.b16 %v1013
        %v1085 = vunpack.c.l.b16 %v1014
        %v1086 = vunpack.c.l.b16 %v1015
        %v1087 = vunpack.c.l.b16 %v1016
        %v1088 = vunpack.c.l.b16 %v1017
        %v1089 = vunpack.c.l.b16 %v1018
        %v1090 = vunpack.c.l.b16 %v1019
        %v1091 = vunpack.c.l.b16 %v1020
        %v1092 = vunpack.c.l.b16 %v1021
        %v1093 = vunpack.c.l.b16 %v1022
        %v1094 = vunpack.c.l.b16 %v1023
        %v1095 = vunpack.c.l.b16 %v1024
        %v1096 = vunpack.c.l.b16 %v1025
        %v1097 = vunpack.c.l.b16 %v1026
        %v1098 = vunpack.c.l.b16 %v1027
        %v1099 = vunpack.c.l.b16 %v1028
        %v1100 = vunpack.c.l.b16 %v1029
        %v1101 = vunpack.c.l.b16 %v1030
        %v1102 = vunpack.c.l.b16 %v1031
        %v1103 = vunpack.c.l.b16 %v1032
        %v1104 = vunpack.c.l.b16 %v1033
        %v1105 = vunpack.c.l.b16 %v1034
        %v1106 = vunpack.c.l.b16 %v1035
        %v1107 = vunpack.c.l.b16 %v1036
        %v1108 = vunpack.c.l.b16 %v1037
        %v1109 = vpack.c.b16 %v1078, %v1077
        %v1110 = vpack.c.b16 %v1080, %v1079
        %v1111 = vpack.c.b16 %v1082, %v1081
        %v1112 = vpack.c.b16 %v1084, %v1083
        %v1113 = vpack.c.b16 %v1086, %v1085
        %v1114 = vpack.c.b16 %v1088, %v1087
        %v1115 = vpack.c.b16 %v1090, %v1089
        %v1116 = vpack.c.b16 %v1092, %v1091
        %v1117 = vpack.c.b16 %v1094, %v1093
        %v1118 = vpack.c.b16 %v1096, %v1095
        %v1119 = vpack.c.b16 %v1098, %v1097
        %v1120 = vpack.c.b16 %v1100, %v1099
        %v1121 = vpack.c.b16 %v1102, %v1101
        %v1122 = vpack.c.b16 %v1104, %v1103
        %v1123 = vpack.c.b16 %v1106, %v1105
        %v1124 = vpack.c.b16 %v1108, %v1107
        %1141 = vmatprep.subr.bf16.mxu0 0
        %1142 = vmatpush1.bf16.msra.mxu0 %v1109
        %1143 = vmatprep.subr.bf16.mxu0 0
        %1144 = vmatpush1.bf16.msra.mxu0 %v1110
        %1145 = vmatprep.subr.bf16.mxu0 0
        %1146 = vmatpush1.bf16.msra.mxu0 %v1111
        %1147 = vmatprep.subr.bf16.mxu0 0
        %1148 = vmatpush1.bf16.msra.mxu0 %v1112
        %1149 = vmatprep.subr.bf16.mxu0 0
        %1150 = vmatpush1.bf16.msra.mxu0 %v1113
        %1151 = vmatprep.subr.bf16.mxu0 0
        %1152 = vmatpush1.bf16.msra.mxu0 %v1114
        %1153 = vmatprep.subr.bf16.mxu0 0
        %1154 = vmatpush1.bf16.msra.mxu0 %v1115
        %1155 = vmatprep.subr.bf16.mxu0 0
        %1156 = vmatpush1.bf16.msra.mxu0 %v1116
        %1157 = vmatprep.subr.bf16.mxu0 0
        %1158 = vmatpush1.bf16.msra.mxu0 %v1117
        %1159 = vmatprep.subr.bf16.mxu0 0
        %1160 = vmatpush1.bf16.msra.mxu0 %v1118
        %1161 = vmatprep.subr.bf16.mxu0 0
        %1162 = vmatpush1.bf16.msra.mxu0 %v1119
        %1163 = vmatprep.subr.bf16.mxu0 0
        %1164 = vmatpush1.bf16.msra.mxu0 %v1120
        %1165 = vmatprep.subr.bf16.mxu0 0
        %1166 = vmatpush1.bf16.msra.mxu0 %v1121
        %1167 = vmatprep.subr.bf16.mxu0 0
        %1168 = vmatpush1.bf16.msra.mxu0 %v1122
        %1169 = vmatprep.subr.bf16.mxu0 0
        %1170 = vmatpush1.bf16.msra.mxu0 %v1123
        %1171 = vmatprep.subr.bf16.mxu0 0
        %1172 = vmatpush1.bf16.msra.mxu0 %v1124
        %1173 = vmatprep.mubr.bf16.mxu0 %v1005
        %1174 = vmatmul.mubr.bf16.gmra.mrb[0].mxu0 %v1004
        %v1175 = vpop.f32.mrb[0].mxu0
        %v1176 = vadd.f32 %v1043, %v1175
        %v1177 = vpop.f32.mrb[0].mxu0
        %v1178 = vpop.f32.mrb[0].mxu0
        %v1179 = vadd.f32 %v1043, %v1178
        %v1180 = vpop.f32.mrb[0].mxu0
        %1181 = vdwg.mxu0
        %1182 = vst [vmem:[%s326] sm:$0xff] %v1176
        %1183 = vst [vmem:[%s326 + $0x8] sm:$0xff] %v1179
        %s1184 = sand.u32 %s225, 1
        %s1185 = scalar_lea.sflag [#allocation3], %s1184
        %s1186 = sand.u32 %s225, 1
        %s1187 = smul.addr %s1186, 16
        %s1188 = scalar_lea.vmem [#allocation2], %s1187
        // Predicated region
        $region57: #{sharelock_mlp_pallas.1} parent=55 // pred_check
          %p1189 = pneg %p235
        $region58: #{sharelock_mlp_pallas.1} parent=55 // pred_check_branch
          %1191 = sbr.rel (%p1189) target = $region60
        $region59: #{sharelock_mlp_pallas.1} parent=55 // pred_region
          %s1192 = smul.u32 2, %s23
          %s1194 = ssub.s32 256, 256
          %1195 = vsyncadd %s1185, %s1194
          %s1196 = smul.addr %s1192, 128
          %s1197 = scalar_lea.hbm %s9, %s1196
          %s1198 = sshll.u32 %s1188, 4
          %s1199 = int_to_ptr.vmem [resolvable:$true] %s1198
          %1204 = dma.vmem_to_hbm [thread:$0]  %s1199, 256, %s1197, %s1185, 128, 128, 8
        $region60: #{sharelock_mlp_pallas.1} parent=55 // pred_fallthru
          _
      $region56: #{sharelock_mlp_pallas.1} parent=5 // pred_fallthru
        _
      %p1205 = scmp.le.s32.totalorder 2, %s18
      // Predicated region
      $region61: #{sharelock_mlp_pallas.1} parent=5 // pred_check
        %p1206 = pneg %p1205
      $region62: #{sharelock_mlp_pallas.1} parent=5 // pred_check_branch
        %1208 = sbr.rel (%p1206) target = $region64
      $region63: #{sharelock_mlp_pallas.1} parent=5 // pred_region
        %s1209 = ssub.s32 %s18, 2
        // Predicated region
        $region65: #{sharelock_mlp_pallas.1} parent=63 // pred_check
          %p1210 = pneg %p241
        $region66: #{sharelock_mlp_pallas.1} parent=63 // pred_check_branch
          %1212 = sbr.rel (%p1210) target = $region68
        $region67: #{sharelock_mlp_pallas.1} parent=63 // pred_region
          %s1213 = sand.u32 %s226, 1
          %s1214 = scalar_lea.sflag [#allocation3], %s1213
          %s1215 = sand.u32 %s226, 1
          %s1216 = smul.addr %s1215, 16
          %s1217 = scalar_lea.vmem [#allocation2], %s1216
          %1218 = dma.done %s1214, 256
        $region68: #{sharelock_mlp_pallas.1} parent=63 // pred_fallthru
          _
      $region64: #{sharelock_mlp_pallas.1} parent=5 // pred_fallthru
        _
    $region6: #{sharelock_mlp_pallas.1} parent=1 // loop_footer
      %s22 = sadd.s32 1, %s18
    $region7: #{sharelock_mlp_pallas.1} parent=1 // loop_footer_branch
      %17 = sbr.rel target = $region3
    $region8: #{sharelock_mlp_pallas.1} parent=1 // loop_exit
      _
    %1219 = vsyncpa [#allocation3], 1
    %s1220 = scalar_lea.sflag [#allocation3], 1
    %1221 = vsyncpa %s1220, 1

</llo_original>
